<compile_context>
chip_gen: v5e
topology: v5e:2x2
jax: 0.10.0
libtpu: 0.0.40
codegen_flags: <defaults>
</compile_context>

<pallas_src>
import jax
import jax.numpy as jnp
from jax.experimental import pallas as pl
from jax.experimental.pallas import tpu as pltpu

LANE = 128  # TPU lane width; only hidden (VMEM-resident weight) dims are padded.


def _round_up(n, m):
    return ((n + m - 1) // m) * m


def mlp_kernel(x_ref, w1_ref, b1_ref, w2_ref, b2_ref, w3_ref, b3_ref, o_ref):
    # x tile: (TB, in_size) f32 -> bf16 for the MXU; weights are already bf16.
    x = x_ref[...].astype(jnp.bfloat16)

    # Layer 1: Linear + ReLU (f32 accumulate, f32 bias/ReLU)
    h1 = jnp.dot(x, w1_ref[...], preferred_element_type=jnp.float32) + b1_ref[...]
    h1 = jnp.maximum(h1, 0.0).astype(jnp.bfloat16)

    # Layer 2: Linear + ReLU
    h2 = jnp.dot(h1, w2_ref[...], preferred_element_type=jnp.float32) + b2_ref[...]
    h2 = jnp.maximum(h2, 0.0).astype(jnp.bfloat16)

    # Layer 3: Linear (output head, no activation). Unpadded (narrow-lane)
    # store: masked vst, but HBM bytes saved dwarf the store-slot cost.
    o_ref[...] = (jnp.dot(h2, w3_ref[...], preferred_element_type=jnp.float32)
                  + b3_ref[...]).astype(o_ref.dtype)


def prepare_params(params, lane=LANE):
    """One-time weight preparation (hoisted out of the per-call path).

    Casts weights to bf16 and zero-pads ONLY the hidden dims to the lane width
    so the two inner matmuls are lane-dense. The input dim of w1 and the output
    dim of w3 are left unpadded so the streamed activations stay slim.
    Zero weight/bias padding keeps the math exactly equal to the unpadded MLP.
    """
    in_size, h1 = params["w1"].shape
    h2 = params["w2"].shape[1]
    out_size = params["w3"].shape[1]
    h1p, h2p = _round_up(h1, lane), _round_up(h2, lane)

    def pad_w(w, rows, cols):
        o = jnp.zeros((rows, cols), jnp.bfloat16)
        return o.at[: w.shape[0], : w.shape[1]].set(w.astype(jnp.bfloat16))

    def pad_b(b, cols):
        o = jnp.zeros((1, cols), jnp.float32)
        return o.at[:, : b.shape[1]].set(b.astype(jnp.float32))

    return {
        "w1": pad_w(params["w1"], in_size, h1p), "b1": pad_b(params["b1"], h1p),
        "w2": pad_w(params["w2"], h1p, h2p),     "b2": pad_b(params["b2"], h2p),
        "w3": pad_w(params["w3"], h2p, out_size), "b3": pad_b(params["b3"], out_size),
    }


def agent_forward(x, prepared, *, block_b=4096, split_threshold=1024):
    """Fused 3-layer MLP forward as a single batch-tiled Pallas kernel.

    x: (B, input_size) float32 (unpadded)
    prepared: output of prepare_params() (bf16 weights, f32 biases)
    """
    B, in_size = x.shape
    w1, b1 = prepared["w1"], prepared["b1"]
    w2, b2 = prepared["w2"], prepared["b2"]
    w3, b3 = prepared["w3"], prepared["b3"]
    out_size = w3.shape[1]

    # Batch tile selection:
    #   * Small B: one block equal to the full array (block == array dims is
    #     always legal, regardless of the (8,128) rule).
    #   * Large B: >=2 tiles (multiple of 8 rows) so v7x's two TensorCores both
    #     get work; ragged last tile is handled by Pallas boundary masking
    #     (rows are independent, so OOB rows only feed discarded output rows).
    if B <= 2 * split_threshold:
        tb = B
    else:
        tb = min(block_b, _round_up(pl.cdiv(B, 2), 8))
    num_tiles = pl.cdiv(B, tb)

    def resident(a):
        # Same block index every grid step -> stays VMEM-resident across grid.
        return pl.BlockSpec(a.shape, lambda i: (0, 0))

    return pl.pallas_call(
        mlp_kernel,
        out_shape=jax.ShapeDtypeStruct((B, out_size), jnp.float32),
        grid=(num_tiles,),
        in_specs=[
            pl.BlockSpec((tb, in_size), lambda i: (i, 0)),   # x: streamed, unpadded
            resident(w1), resident(b1),
            resident(w2), resident(b2),
            resident(w3), resident(b3),
        ],
        out_specs=pl.BlockSpec((tb, out_size), lambda i: (i, 0)),  # y: unpadded
        compiler_params=pltpu.CompilerParams(
            dimension_semantics=("parallel",),  # v7x: shard batch tiles over 2 TCs
        ),
    )(x, w1, b1, w2, b2, w3, b3)


def init_params(key, input_size, hidden_size1, hidden_size2, output_size):
    """Deterministic init matching PyTorch nn.Linear default
    (uniform(-1/sqrt(fan_in), 1/sqrt(fan_in))). Weights stored (in, out) == W.T."""
    def linear(k, fan_in, fan_out):
        kw, kb = jax.random.split(k)
        bound = 1.0 / jnp.sqrt(fan_in)
        w = jax.random.uniform(kw, (fan_in, fan_out), jnp.float32, -bound, bound)
        b = jax.random.uniform(kb, (1, fan_out), jnp.float32, -bound, bound)
        return w, b

    k1, k2, k3 = jax.random.split(key, 3)
    w1, b1 = linear(k1, input_size, hidden_size1)
    w2, b2 = linear(k2, hidden_size1, hidden_size2)
    w3, b3 = linear(k3, hidden_size2, output_size)
    return {"w1": w1, "b1": b1, "w2": w2, "b2": b2, "w3": w3, "b3": b3}


def reference_forward_bf16(x, p):
    """Reference with the same bf16-matmul / f32-accumulate recipe as the kernel."""
    bf = jnp.bfloat16
    h1 = jnp.maximum(
        jnp.dot(x.astype(bf), p["w1"].astype(bf),
                preferred_element_type=jnp.float32) + p["b1"], 0.0)
    h2 = jnp.maximum(
        jnp.dot(h1.astype(bf), p["w2"].astype(bf),
                preferred_element_type=jnp.float32) + p["b2"], 0.0)
    return jnp.dot(h2.astype(bf), p["w3"].astype(bf),
                   preferred_element_type=jnp.float32) + p["b3"]


def reference_forward_f32(x, p):
    h1 = jnp.maximum(x @ p["w1"] + p["b1"], 0.0)
    h2 = jnp.maximum(h1 @ p["w2"] + p["b2"], 0.0)
    return h2 @ p["w3"] + p["b3"]


if __name__ == "__main__":
    # Shapes consistent with the Agent MLP:
    #   input_size=16 (obj_pos(3)+joint_pos+joint_vel, padded obs),
    #   hidden1=32, hidden2=32, output=8; rollout-sized batch=4.
    # TODO(synk): training_step / Adam / MSELoss / save_model / load_model /
    # process_obs are host-side training utilities, not part of forward(x).
    B, IN, H1, H2, OUT = 4, 16, 32, 32, 8

    key = jax.random.PRNGKey(0)
    kx, kp, kx2 = jax.random.split(key, 3)
    x = jax.random.normal(kx, (B, IN), dtype=jnp.float32)
    params = init_params(kp, IN, H1, H2, OUT)
    prepared = prepare_params(params)   # one-time: pad hidden dims + bf16 cast

    # --- small (rollout) batch: single full-array tile ----------------------
    y = jax.block_until_ready(agent_forward(x, prepared))
    assert y.shape == (B, OUT)

    y_ref_bf16 = reference_forward_bf16(x, params)
    assert jnp.allclose(y, y_ref_bf16, atol=1e-3, rtol=1e-3), \
        "mismatch vs bf16 reference"
    y_ref_f32 = reference_forward_f32(x, params)
    assert jnp.allclose(y, y_ref_f32, atol=5e-2, rtol=5e-2), \
        "mismatch vs f32 reference"

    # --- larger (training) batch: multi-tile path (2 tiles, v7x-friendly) ---
    B2 = 4096
    x2 = jax.random.normal(kx2, (B2, IN), dtype=jnp.float32)
    y2 = jax.block_until_ready(agent_forward(x2, prepared, block_b=2048))
    assert y2.shape == (B2, OUT)
    y2_ref = reference_forward_bf16(x2, params)
    assert jnp.allclose(y2, y2_ref, atol=1e-3, rtol=1e-3), \
        "mismatch vs bf16 reference (multi-tile)"

    print("KERNEL_OK")
</pallas_src>

<mosaic_0001>
module attributes {stable_mosaic.version = 11 : i64} {
  func.func @mlp_kernel(%arg0: i32, %arg1: memref<4x16xf32, #tpu.memory_space<vmem>>, %arg2: memref<16x128xbf16, #tpu.memory_space<vmem>>, %arg3: memref<1x128xf32, #tpu.memory_space<vmem>>, %arg4: memref<128x128xbf16, #tpu.memory_space<vmem>>, %arg5: memref<1x128xf32, #tpu.memory_space<vmem>>, %arg6: memref<128x8xbf16, #tpu.memory_space<vmem>>, %arg7: memref<1x8xf32, #tpu.memory_space<vmem>>, %arg8: memref<4x8xf32, #tpu.memory_space<vmem>>) attributes {dimension_semantics = [#tpu.dimension_semantics<parallel>], iteration_bounds = array<i64: 1>, scalar_prefetch = 0 : i64, scratch_operands = 0 : i64, tpu.core_type = #tpu.core_type<tc>, window_params = [{transform_indices = @transform_0, window_bounds = array<i64: 4, 16>}, {pipeline_mode = #tpu.pipeline_mode<synchronous>, transform_indices = @transform_1, window_bounds = array<i64: 16, 128>}, {pipeline_mode = #tpu.pipeline_mode<synchronous>, transform_indices = @transform_2, window_bounds = array<i64: 1, 128>}, {pipeline_mode = #tpu.pipeline_mode<synchronous>, transform_indices = @transform_3, window_bounds = array<i64: 128, 128>}, {pipeline_mode = #tpu.pipeline_mode<synchronous>, transform_indices = @transform_4, window_bounds = array<i64: 1, 128>}, {pipeline_mode = #tpu.pipeline_mode<synchronous>, transform_indices = @transform_5, window_bounds = array<i64: 128, 8>}, {pipeline_mode = #tpu.pipeline_mode<synchronous>, transform_indices = @transform_6, window_bounds = array<i64: 1, 8>}, {transform_indices = @transform_7, window_bounds = array<i64: 4, 8>}]} {
    %c0 = arith.constant 0 : index
    %c0_0 = arith.constant 0 : index
    %0 = vector.load %arg1[%c0, %c0_0] : memref<4x16xf32, #tpu.memory_space<vmem>>, vector<4x16xf32>
    %1 = arith.truncf %0 : vector<4x16xf32> to vector<4x16xbf16>
    %c0_1 = arith.constant 0 : index
    %c0_2 = arith.constant 0 : index
    %2 = vector.load %arg2[%c0_1, %c0_2] : memref<16x128xbf16, #tpu.memory_space<vmem>>, vector<16x128xbf16>
    %cst = arith.constant dense<0.000000e+00> : vector<4x128xf32>
    %3 = tpu.matmul %1, %2, %cst {dimension_numbers = #tpu.dot_dimension_numbers<[1], [0], [0], [1], [0, 0, 1, 1], [], []>} : vector<4x16xbf16>, vector<16x128xbf16>, vector<4x128xf32> -> vector<4x128xf32>
    %c0_3 = arith.constant 0 : index
    %c0_4 = arith.constant 0 : index
    %4 = vector.load %arg3[%c0_3, %c0_4] : memref<1x128xf32, #tpu.memory_space<vmem>>, vector<1x128xf32>
    %5 = vector.broadcast %4 : vector<1x128xf32> to vector<4x128xf32>
    %6 = arith.addf %3, %5 : vector<4x128xf32>
    %cst_5 = arith.constant 0.000000e+00 : f32
    %7 = vector.broadcast %cst_5 : f32 to vector<4x128xf32>
    %8 = arith.maximumf %6, %7 : vector<4x128xf32>
    %9 = arith.truncf %8 : vector<4x128xf32> to vector<4x128xbf16>
    %c0_6 = arith.constant 0 : index
    %c0_7 = arith.constant 0 : index
    %10 = vector.load %arg4[%c0_6, %c0_7] : memref<128x128xbf16, #tpu.memory_space<vmem>>, vector<128x128xbf16>
    %cst_8 = arith.constant dense<0.000000e+00> : vector<4x128xf32>
    %11 = tpu.matmul %9, %10, %cst_8 {dimension_numbers = #tpu.dot_dimension_numbers<[1], [0], [0], [1], [0, 0, 1, 1], [], []>} : vector<4x128xbf16>, vector<128x128xbf16>, vector<4x128xf32> -> vector<4x128xf32>
    %c0_9 = arith.constant 0 : index
    %c0_10 = arith.constant 0 : index
    %12 = vector.load %arg5[%c0_9, %c0_10] : memref<1x128xf32, #tpu.memory_space<vmem>>, vector<1x128xf32>
    %13 = vector.broadcast %12 : vector<1x128xf32> to vector<4x128xf32>
    %14 = arith.addf %11, %13 : vector<4x128xf32>
    %cst_11 = arith.constant 0.000000e+00 : f32
    %15 = vector.broadcast %cst_11 : f32 to vector<4x128xf32>
    %16 = arith.maximumf %14, %15 : vector<4x128xf32>
    %17 = arith.truncf %16 : vector<4x128xf32> to vector<4x128xbf16>
    %c0_12 = arith.constant 0 : index
    %c0_13 = arith.constant 0 : index
    %18 = vector.load %arg6[%c0_12, %c0_13] : memref<128x8xbf16, #tpu.memory_space<vmem>>, vector<128x8xbf16>
    %cst_14 = arith.constant dense<0.000000e+00> : vector<4x8xf32>
    %19 = tpu.matmul %17, %18, %cst_14 {dimension_numbers = #tpu.dot_dimension_numbers<[1], [0], [0], [1], [0, 0, 1, 1], [], []>} : vector<4x128xbf16>, vector<128x8xbf16>, vector<4x8xf32> -> vector<4x8xf32>
    %c0_15 = arith.constant 0 : index
    %c0_16 = arith.constant 0 : index
    %20 = vector.load %arg7[%c0_15, %c0_16] : memref<1x8xf32, #tpu.memory_space<vmem>>, vector<1x8xf32>
    %21 = vector.broadcast %20 : vector<1x8xf32> to vector<4x8xf32>
    %22 = arith.addf %19, %21 : vector<4x8xf32>
    %c0_17 = arith.constant 0 : index
    %c0_18 = arith.constant 0 : index
    %23 = vector.load %arg8[%c0_17, %c0_18] : memref<4x8xf32, #tpu.memory_space<vmem>>, vector<4x8xf32>
    tpu.vector_store %arg8[%c0_17, %c0_18], %22 {strides = array<i32>} : memref<4x8xf32, #tpu.memory_space<vmem>>, vector<4x8xf32>,
    return
  }
  func.func @transform_0(%arg0: i32) -> (i32, i32) {
    %c0_i32 = arith.constant 0 : i32
    %c0_i32_0 = arith.constant 0 : i32
    return %arg0, %c0_i32 : i32, i32
  }
  func.func @transform_1(%arg0: i32) -> (i32, i32) {
    %c0_i32 = arith.constant 0 : i32
    %c0_i32_0 = arith.constant 0 : i32
    %c0_i32_1 = arith.constant 0 : i32
    return %c0_i32, %c0_i32_0 : i32, i32
  }
  func.func @transform_2(%arg0: i32) -> (i32, i32) {
    %c0_i32 = arith.constant 0 : i32
    %c0_i32_0 = arith.constant 0 : i32
    %c0_i32_1 = arith.constant 0 : i32
    return %c0_i32, %c0_i32_0 : i32, i32
  }
  func.func @transform_3(%arg0: i32) -> (i32, i32) {
    %c0_i32 = arith.constant 0 : i32
    %c0_i32_0 = arith.constant 0 : i32
    %c0_i32_1 = arith.constant 0 : i32
    return %c0_i32, %c0_i32_0 : i32, i32
  }
  func.func @transform_4(%arg0: i32) -> (i32, i32) {
    %c0_i32 = arith.constant 0 : i32
    %c0_i32_0 = arith.constant 0 : i32
    %c0_i32_1 = arith.constant 0 : i32
    return %c0_i32, %c0_i32_0 : i32, i32
  }
  func.func @transform_5(%arg0: i32) -> (i32, i32) {
    %c0_i32 = arith.constant 0 : i32
    %c0_i32_0 = arith.constant 0 : i32
    %c0_i32_1 = arith.constant 0 : i32
    return %c0_i32, %c0_i32_0 : i32, i32
  }
  func.func @transform_6(%arg0: i32) -> (i32, i32) {
    %c0_i32 = arith.constant 0 : i32
    %c0_i32_0 = arith.constant 0 : i32
    %c0_i32_1 = arith.constant 0 : i32
    return %c0_i32, %c0_i32_0 : i32, i32
  }
  func.func @transform_7(%arg0: i32) -> (i32, i32) {
    %c0_i32 = arith.constant 0 : i32
    %c0_i32_0 = arith.constant 0 : i32
    return %arg0, %c0_i32 : i32, i32
  }
}

</mosaic_0001>

<llo_original>
// kernel: tpu_custom_call.1
$region0: #{tpu_custom_call.1}
  #allocation0 [shape = 'u32[]', space=smem, size = 0x4, offset = 0x4, fixed_abs, tag = 'smem constant byte address 0x4 - core index']
  #allocation1 [shape = 'u32[72,128]{1,0:T(1,128)}', space=vmem, size = 0x9000, scoped, tag = 'internal scratch']
  %s0 = inlined_call_operand.vmem [shape: f32[4,16], index: 0, kind: input, shape index: {}]
  %s1 = inlined_call_operand.hbm [shape: bf16[16,128], index: 1, kind: input, shape index: {}]
  %s2 = inlined_call_operand.hbm [shape: f32[1,128], index: 2, kind: input, shape index: {}]
  %s3 = inlined_call_operand.vmem [shape: bf16[128,128], index: 3, kind: input, shape index: {}]
  %s4 = inlined_call_operand.hbm [shape: f32[1,128], index: 4, kind: input, shape index: {}]
  %s5 = inlined_call_operand.vmem [shape: bf16[128,8], index: 5, kind: input, shape index: {}]
  %s6 = inlined_call_operand.vmem [shape: f32[1,8], index: 6, kind: input, shape index: {}]
  %s7 = inlined_call_operand.hbm [shape: f32[4,8], index: 7, kind: output, shape index: {}]
  %s8 = sld [smem:[#allocation0]]
  $region50: #{tpu_custom_call.1} parent=0
    _
  %s10 = ssub.s32 1, %s8
  %s11 = scalar_select 0, %s10, %s8
  $region1: #{tpu_custom_call.1} parent=0
    #allocation2 [shape = 'u8[4096]{0}', space=vmem, size = 0x1000, scoped, tag = 'input window, operand 1, single buffered']
    #allocation3 [shape = 's32[1]{0}', space=sflag, size = 0x4, scoped, tag = 'scoped memory for tpu_custom_call.1']
    #allocation4 [shape = 's32[1]{0}', space=sflag, size = 0x4, scoped, tag = 'scoped memory for tpu_custom_call.1']
    #allocation5 [shape = 'u8[512]{0}', space=vmem, size = 0x400, scoped, tag = 'input window, operand 2, single buffered']
    #allocation6 [shape = 's32[1]{0}', space=sflag, size = 0x4, scoped, tag = 'scoped memory for tpu_custom_call.1']
    #allocation7 [shape = 'u8[512]{0}', space=vmem, size = 0x400, scoped, tag = 'input window, operand 4, single buffered']
    #allocation8 [shape = 'u8[2048]{0}', space=vmem, size = 0x800, scoped, tag = 'output window, operand 0, single buffered']
    %12 = vsyncpa [#allocation3], 0
    %13 = vsyncpa [#allocation6], 0
    %14 = vsyncpa [#allocation4], 0
    // Predicated region
    $region2: #{tpu_custom_call.1} parent=1 // pred_check
      _
    $region3: #{tpu_custom_call.1} parent=1 // pred_check_branch
      %16 = sbr.rel (0) target = $region5
    $region4: #{tpu_custom_call.1} parent=1 // pred_region
      _
    $region5: #{tpu_custom_call.1} parent=1 // pred_fallthru
      _
    // Predicated region
    $region6: #{tpu_custom_call.1} parent=1 // pred_check
      _
    $region7: #{tpu_custom_call.1} parent=1 // pred_check_branch
      %18 = sbr.rel (0) target = $region9
    $region8: #{tpu_custom_call.1} parent=1 // pred_region
      %20 = vsyncadd [#allocation3], 0
      %s21 = sshll.u32 %s1, 4
      %s22 = int_to_ptr.hbm [resolvable:$true] %s21
      %s23 = sshll.u32 [#allocation2], 4
      %s24 = int_to_ptr.vmem [resolvable:$true] %s23
      %29 = dma.hbm_to_vmem [thread:$0]  %s22, 128, %s24, [#allocation3], 64, 64, 4
    $region9: #{tpu_custom_call.1} parent=1 // pred_fallthru
      _
    // Predicated region
    $region10: #{tpu_custom_call.1} parent=1 // pred_check
      _
    $region11: #{tpu_custom_call.1} parent=1 // pred_check_branch
      %31 = sbr.rel (0) target = $region13
    $region12: #{tpu_custom_call.1} parent=1 // pred_region
      %33 = vsyncadd [#allocation6], 0
      %s35 = sshll.u32 %s2, 4
      %s36 = int_to_ptr.hbm [resolvable:$true] %s35
      %s37 = sshll.u32 [#allocation5], 4
      %s38 = int_to_ptr.vmem [resolvable:$true] %s37
      %40 = dma.hbm_to_vmem [thread:$0]  %s36, 16, %s38, [#allocation6]
    $region13: #{tpu_custom_call.1} parent=1 // pred_fallthru
      _
    // Predicated region
    $region14: #{tpu_custom_call.1} parent=1 // pred_check
      _
    $region15: #{tpu_custom_call.1} parent=1 // pred_check_branch
      %42 = sbr.rel (0) target = $region17
    $region16: #{tpu_custom_call.1} parent=1 // pred_region
      _
    $region17: #{tpu_custom_call.1} parent=1 // pred_fallthru
      _
    // Predicated region
    $region18: #{tpu_custom_call.1} parent=1 // pred_check
      _
    $region19: #{tpu_custom_call.1} parent=1 // pred_check_branch
      %44 = sbr.rel (0) target = $region21
    $region20: #{tpu_custom_call.1} parent=1 // pred_region
      %46 = vsyncadd [#allocation6], 0
      %s48 = sshll.u32 %s4, 4
      %s49 = int_to_ptr.hbm [resolvable:$true] %s48
      %s50 = sshll.u32 [#allocation7], 4
      %s51 = int_to_ptr.vmem [resolvable:$true] %s50
      %53 = dma.hbm_to_vmem [thread:$0]  %s49, 16, %s51, [#allocation6]
    $region21: #{tpu_custom_call.1} parent=1 // pred_fallthru
      _
    // Predicated region
    $region22: #{tpu_custom_call.1} parent=1 // pred_check
      _
    $region23: #{tpu_custom_call.1} parent=1 // pred_check_branch
      %55 = sbr.rel (0) target = $region25
    $region24: #{tpu_custom_call.1} parent=1 // pred_region
      _
    $region25: #{tpu_custom_call.1} parent=1 // pred_fallthru
      _
    // Predicated region
    $region26: #{tpu_custom_call.1} parent=1 // pred_check
      _
    $region27: #{tpu_custom_call.1} parent=1 // pred_check_branch
      %57 = sbr.rel (0) target = $region29
    $region28: #{tpu_custom_call.1} parent=1 // pred_region
      _
    $region29: #{tpu_custom_call.1} parent=1 // pred_fallthru
      _
    // Predicated region
    $region30: #{tpu_custom_call.1} parent=1 // pred_check
      _
    $region31: #{tpu_custom_call.1} parent=1 // pred_check_branch
      %59 = sbr.rel (0) target = $region33
    $region32: #{tpu_custom_call.1} parent=1 // pred_region
      %61 = dma.done [#allocation3], 128
    $region33: #{tpu_custom_call.1} parent=1 // pred_fallthru
      _
    // Predicated region
    $region34: #{tpu_custom_call.1} parent=1 // pred_check
      _
    $region35: #{tpu_custom_call.1} parent=1 // pred_check_branch
      %63 = sbr.rel (0) target = $region37
    $region36: #{tpu_custom_call.1} parent=1 // pred_region
      %65 = dma.done [#allocation6], 16
    $region37: #{tpu_custom_call.1} parent=1 // pred_fallthru
      _
    // Predicated region
    $region38: #{tpu_custom_call.1} parent=1 // pred_check
      _
    $region39: #{tpu_custom_call.1} parent=1 // pred_check_branch
      %67 = sbr.rel (0) target = $region41
    $region40: #{tpu_custom_call.1} parent=1 // pred_region
      %69 = dma.done [#allocation6], 16
    $region41: #{tpu_custom_call.1} parent=1 // pred_fallthru
      _
    %v71 = vld [vmem:[%s0] sm:$0xf]
    %v72 = vpack.c.bf16 %v71, %v71
    %v73 = vld [vmem:[#allocation2] sm:$0xf]
    %v74 = vld [vmem:[#allocation2 + $0x4] sm:$0xf]
    %v75 = vld [vmem:[#allocation5] sm:$0x1]
    %v77 = vperm.slane %v75, 0
    %v81 = vunpack.c.l.b16 %v73
    %v82 = vunpack.c.l.b16 %v74
    %v83 = vpack.c.b16 %v82, %v81
    %vm85 = vcmask 130048
    %v87 = vsel %vm85, %v72, 0
    %89 = vmatpush.bf16.msra.mxu0 0
    %90 = vmatpush.bf16.msra.mxu0 0
    %91 = vmatpush.bf16.msra.mxu0 0
    %92 = vmatpush.bf16.msra.mxu0 0
    %93 = vmatpush.bf16.msra.mxu0 0
    %94 = vmatpush.bf16.msra.mxu0 0
    %95 = vmatpush.bf16.msra.mxu0 0
    %96 = vmatpush.bf16.msra.mxu0 %v83
    %97 = vmatmul.bf16.gmra.mxu0 %v87
    %v98 = vpop.f32.mrf.mxu0
    %v99 = vadd.f32 %v77, %v98
    %v100 = vpop.f32.mrf.mxu0
    %101 = vdwg.mxu0
    %v102 = vmax.f32 %v99, 0.0
    %v103 = vpack.c.bf16 %v102, %v102
    %v104 = vld [vmem:[%s3] sm:$0xf]
    %v105 = vld [vmem:[%s3 + $0x4] sm:$0xf]
    %v106 = vld [vmem:[%s3 + $0x8] sm:$0xf]
    %v107 = vld [vmem:[%s3 + $0xc] sm:$0xf]
    %v108 = vld [vmem:[%s3 + $0x10] sm:$0xf]
    %v109 = vld [vmem:[%s3 + $0x14] sm:$0xf]
    %v110 = vld [vmem:[%s3 + $0x18] sm:$0xf]
    %v111 = vld [vmem:[%s3 + $0x1c] sm:$0xf]
    %v112 = vld [vmem:[%s3 + $0x20] sm:$0xf]
    %v113 = vld [vmem:[%s3 + $0x24] sm:$0xf]
    %v114 = vld [vmem:[%s3 + $0x28] sm:$0xf]
    %v115 = vld [vmem:[%s3 + $0x2c] sm:$0xf]
    %v116 = vld [vmem:[%s3 + $0x30] sm:$0xf]
    %v117 = vld [vmem:[%s3 + $0x34] sm:$0xf]
    %v118 = vld [vmem:[%s3 + $0x38] sm:$0xf]
    %v119 = vld [vmem:[%s3 + $0x3c] sm:$0xf]
    %v120 = vld [vmem:[#allocation7] sm:$0x1]
    %v122 = vperm.slane %v120, 0
    %v140 = vunpack.c.l.b16 %v104
    %v141 = vunpack.c.l.b16 %v105
    %v142 = vunpack.c.l.b16 %v106
    %v143 = vunpack.c.l.b16 %v107
    %v144 = vunpack.c.l.b16 %v108
    %v145 = vunpack.c.l.b16 %v109
    %v146 = vunpack.c.l.b16 %v110
    %v147 = vunpack.c.l.b16 %v111
    %v148 = vunpack.c.l.b16 %v112
    %v149 = vunpack.c.l.b16 %v113
    %v150 = vunpack.c.l.b16 %v114
    %v151 = vunpack.c.l.b16 %v115
    %v152 = vunpack.c.l.b16 %v116
    %v153 = vunpack.c.l.b16 %v117
    %v154 = vunpack.c.l.b16 %v118
    %v155 = vunpack.c.l.b16 %v119
    %v156 = vpack.c.b16 %v141, %v140
    %v157 = vpack.c.b16 %v143, %v142
    %v158 = vpack.c.b16 %v145, %v144
    %v159 = vpack.c.b16 %v147, %v146
    %v160 = vpack.c.b16 %v149, %v148
    %v161 = vpack.c.b16 %v151, %v150
    %v162 = vpack.c.b16 %v153, %v152
    %v163 = vpack.c.b16 %v155, %v154
    %172 = vmatpush.bf16.msra.mxu0 %v163
    %173 = vmatpush.bf16.msra.mxu0 %v162
    %174 = vmatpush.bf16.msra.mxu0 %v161
    %175 = vmatpush.bf16.msra.mxu0 %v160
    %176 = vmatpush.bf16.msra.mxu0 %v159
    %177 = vmatpush.bf16.msra.mxu0 %v158
    %178 = vmatpush.bf16.msra.mxu0 %v157
    %179 = vmatpush.bf16.msra.mxu0 %v156
    %180 = vmatmul.bf16.gmra.mxu0 %v103
    %v181 = vpop.f32.mrf.mxu0
    %v182 = vadd.f32 %v122, %v181
    %v183 = vpop.f32.mrf.mxu0
    %184 = vdwg.mxu0
    %v185 = vmax.f32 %v182, 0.0
    %v186 = vpack.c.bf16 %v185, %v185
    %v187 = vld [vmem:[%s5] sm:$0xf]
    %v188 = vld [vmem:[%s5 + $0x4] sm:$0xf]
    %v189 = vld [vmem:[%s5 + $0x8] sm:$0xf]
    %v190 = vld [vmem:[%s5 + $0xc] sm:$0xf]
    %v191 = vld [vmem:[%s5 + $0x10] sm:$0xf]
    %v192 = vld [vmem:[%s5 + $0x14] sm:$0xf]
    %v193 = vld [vmem:[%s5 + $0x18] sm:$0xf]
    %v194 = vld [vmem:[%s5 + $0x1c] sm:$0xf]
    %v195 = vld [vmem:[%s5 + $0x20] sm:$0xf]
    %v196 = vld [vmem:[%s5 + $0x24] sm:$0xf]
    %v197 = vld [vmem:[%s5 + $0x28] sm:$0xf]
    %v198 = vld [vmem:[%s5 + $0x2c] sm:$0xf]
    %v199 = vld [vmem:[%s5 + $0x30] sm:$0xf]
    %v200 = vld [vmem:[%s5 + $0x34] sm:$0xf]
    %v201 = vld [vmem:[%s5 + $0x38] sm:$0xf]
    %v202 = vld [vmem:[%s5 + $0x3c] sm:$0xf]
    %v203 = vld [vmem:[%s6] sm:$0x1]
    %v205 = vperm.slane %v203, 0
    %v223 = vunpack.c.l.b16 %v187
    %v224 = vunpack.c.l.b16 %v188
    %v225 = vunpack.c.l.b16 %v189
    %v226 = vunpack.c.l.b16 %v190
    %v227 = vunpack.c.l.b16 %v191
    %v228 = vunpack.c.l.b16 %v192
    %v229 = vunpack.c.l.b16 %v193
    %v230 = vunpack.c.l.b16 %v194
    %v231 = vunpack.c.l.b16 %v195
    %v232 = vunpack.c.l.b16 %v196
    %v233 = vunpack.c.l.b16 %v197
    %v234 = vunpack.c.l.b16 %v198
    %v235 = vunpack.c.l.b16 %v199
    %v236 = vunpack.c.l.b16 %v200
    %v237 = vunpack.c.l.b16 %v201
    %v238 = vunpack.c.l.b16 %v202
    %v239 = vpack.c.b16 %v224, %v223
    %v240 = vpack.c.b16 %v226, %v225
    %v241 = vpack.c.b16 %v228, %v227
    %v242 = vpack.c.b16 %v230, %v229
    %v243 = vpack.c.b16 %v232, %v231
    %v244 = vpack.c.b16 %v234, %v233
    %v245 = vpack.c.b16 %v236, %v235
    %v246 = vpack.c.b16 %v238, %v237
    %255 = vmatpush.bf16.msra.mxu0 %v246
    %256 = vmatpush.bf16.msra.mxu0 %v245
    %257 = vmatpush.bf16.msra.mxu0 %v244
    %258 = vmatpush.bf16.msra.mxu0 %v243
    %259 = vmatpush.bf16.msra.mxu0 %v242
    %260 = vmatpush.bf16.msra.mxu0 %v241
    %261 = vmatpush.bf16.msra.mxu0 %v240
    %262 = vmatpush.bf16.msra.mxu0 %v239
    %263 = vmatmul.bf16.gmra.mxu0 %v186
    %v264 = vpop.f32.mrf.mxu0
    %v265 = vadd.f32 %v205, %v264
    %v266 = vpop.f32.mrf.mxu0
    %267 = vdwg.mxu0
    %vm268 = vcmask 60416
    %269 = vst.msk [vmem:[#allocation8] sm:$0xf] %vm268, %v265
    // Predicated region
    $region42: #{tpu_custom_call.1} parent=1 // pred_check
      _
    $region43: #{tpu_custom_call.1} parent=1 // pred_check_branch
      %271 = sbr.rel (0) target = $region45
    $region44: #{tpu_custom_call.1} parent=1 // pred_region
      %273 = vsyncadd [#allocation4], 0
      %s275 = sshll.u32 [#allocation8], 4
      %s276 = int_to_ptr.vmem [resolvable:$true] %s275
      %s277 = sshll.u32 %s7, 4
      %s278 = int_to_ptr.hbm [resolvable:$true] %s277
      %280 = dma.vmem_to_hbm [thread:$0]  %s276, 64, %s278, [#allocation4]
    $region45: #{tpu_custom_call.1} parent=1 // pred_fallthru
      _
    // Predicated region
    $region46: #{tpu_custom_call.1} parent=1 // pred_check
      _
    $region47: #{tpu_custom_call.1} parent=1 // pred_check_branch
      %282 = sbr.rel (0) target = $region49
    $region48: #{tpu_custom_call.1} parent=1 // pred_region
      %284 = dma.done [#allocation4], 64
    $region49: #{tpu_custom_call.1} parent=1 // pred_fallthru
      _
    %285 = vsyncpa [#allocation3], 1
    %286 = vsyncpa [#allocation6], 1
    %287 = vsyncpa [#allocation4], 1

</llo_original>
